<compile_context>
chip_gen: v7x
topology: tpu7x:2x2x1
jax: 0.10.0
libtpu: 0.0.40
codegen_flags: <defaults>
</compile_context>

<pallas_src>
import jax
import jax.numpy as jnp
from jax.experimental import pallas as pl
from jax.experimental.pallas import tpu as pltpu


def _sublane(dtype) -> int:
    """Sublane tile height for a dtype (f32: 8, bf16: 16, int8/fp8: 32)."""
    return {4: 8, 2: 16, 1: 32}.get(jnp.dtype(dtype).itemsize, 8)


def _round_up(x: int, m: int) -> int:
    return ((x + m - 1) // m) * m


def _choose_tb(B: int, dtype, *, max_tb: int = 512, target_blocks: int = 2) -> int:
    """Rows (masks) per block: sublane-aligned, <= max_tb; aims for
    `target_blocks` blocks so the grid can shard over v7x's two TensorCores
    and (for the gather path) double-buffer gathers across steps."""
    sub = _sublane(dtype)
    if B <= sub:
        return B                              # full-dim block (single step)
    tb = _round_up(pl.cdiv(B, target_blocks), sub)
    return int(max(sub, min(max_tb, tb)))


# ----------------------------------------------------------------------------
# Class-agnostic path: plain element-wise sigmoid on lane-dense (TB, HW) tiles.
# ----------------------------------------------------------------------------
def _sigmoid_kernel(x_ref, o_ref):
    # Compute in f32 (v5e has no bf16 VPU/EUP); cast on store.
    o_ref[...] = jax.nn.sigmoid(x_ref[...].astype(jnp.float32)).astype(o_ref.dtype)


# ----------------------------------------------------------------------------
# Class-specific path: gather logits[b, cls[b], :] -> sigmoid, double-buffered.
# ----------------------------------------------------------------------------
def _make_gather_sigmoid_kernel(num_masks: int, tb: int, g1: int, num_blocks: int):
    def kernel(cls_ref, x_hbm, o_ref, gbuf, sem):
        # cls_ref : (B,)        int32 predicted classes (SMEM, scalar-prefetched)
        # x_hbm   : (B, C, HW)  logits, left in HBM (memory_space=pl.ANY)
        # o_ref   : (TB, HW)    output block (VMEM, auto-pipelined writeback)
        # gbuf    : (2, TB, HW) double-buffered gather landing zone
        # sem     : (2,)        one DMA semaphore per buffer slot
        c0 = pl.program_id(0)          # "core" axis (parallel)
        j = pl.program_id(1)           # per-core block axis (sequential)

        def clamp_blk(lin):
            return jnp.minimum(lin, num_blocks - 1)

        blk = clamp_blk(c0 * g1 + j)
        slot = j % 2

        def block_rows(b_idx):
            # Static (unrolled) row list; clamping the tail rows to B-1 keeps
            # every gather in-bounds (no sigmoid of uninitialized VMEM). All
            # SMEM scalar reads happen here, ahead of any DMA wait.
            rows = []
            for t in range(tb):
                r = jnp.minimum(b_idx * tb + t, num_masks - 1)
                rows.append((t, r, cls_ref[r]))
            return rows

        def gather_copy(t, r, c, s):
            return pltpu.make_async_copy(
                x_hbm.at[r, pl.ds(c, 1)],      # (1, HW) selected channel in HBM
                gbuf.at[s, pl.ds(t, 1)],       # (1, HW) row t of slot s
                sem.at[s],
            )

        def issue_block(b_idx, s):
            for t, r, c in block_rows(b_idx):
                gather_copy(t, r, c, s).start()

        def wait_block(b_idx, s):
            # Wait descriptors match the started copies exactly.
            for t, r, c in block_rows(b_idx):
                gather_copy(t, r, c, s).wait()

        # Prologue: prime this core-slice's first block (runs once per slice,
        # so it stays correct when axis 0 is sharded across TensorCores).
        @pl.when(j == 0)
        def _():
            issue_block(blk, slot)

        # Prefetch the next block's gathers into the other slot so their HBM
        # latency overlaps this block's wait + sigmoid + output writeback.
        @pl.when(j + 1 < g1)
        def _():
            issue_block(clamp_blk(c0 * g1 + j + 1), 1 - slot)

        wait_block(blk, slot)
        o_ref[...] = jax.nn.sigmoid(
            gbuf[slot].astype(jnp.float32)).astype(o_ref.dtype)

    return kernel


def mask_rcnn_inference_pallas(pred_mask_logits, pred_classes, out_dtype=None):
    """Soft masks of shape (B, 1, Hm, Wm) — matches torch mask_rcnn_inference."""
    B, C, Hm, Wm = pred_mask_logits.shape
    HW = Hm * Wm
    in_dtype = pred_mask_logits.dtype
    out_dtype = in_dtype if out_dtype is None else jnp.dtype(out_dtype)
    isize = jnp.dtype(in_dtype).itemsize
    osize = jnp.dtype(out_dtype).itemsize

    if B == 0:
        return jnp.zeros((0, 1, Hm, Wm), dtype=out_dtype)

    if C == 1:
        # Class-agnostic: batched sigmoid, lane-dense (TB, HW) blocks, >=2
        # grid steps when B allows so v7x can shard over both TensorCores.
        TB = _choose_tb(B, in_dtype, max_tb=512, target_blocks=2)
        x2d = pred_mask_logits.reshape(B, HW)
        probs = pl.pallas_call(
            _sigmoid_kernel,
            out_shape=jax.ShapeDtypeStruct((B, HW), out_dtype),
            grid_spec=pltpu.PrefetchScalarGridSpec(
                num_scalar_prefetch=0,
                grid=(pl.cdiv(B, TB),),
                in_specs=[pl.BlockSpec((TB, HW), lambda i: (i, 0))],
                out_specs=pl.BlockSpec((TB, HW), lambda i: (i, 0)),
            ),
            compiler_params=pltpu.CompilerParams(
                dimension_semantics=("parallel",)),
            cost_estimate=pl.CostEstimate(
                flops=0,
                transcendentals=B * HW,
                bytes_accessed=B * HW * (isize + osize)),
        )(x2d)
        return probs.reshape(B, 1, Hm, Wm)

    # Class-specific: gather the predicted-class channel of every mask.
    cls = jnp.clip(pred_classes.astype(jnp.int32), 0, C - 1)  # bounds-safe DMA
    # target_blocks=4 -> ~2 blocks per core slice, so the cross-step gather
    # double-buffer actually overlaps work on each TensorCore.
    TB = _choose_tb(B, in_dtype, max_tb=512, target_blocks=4)
    num_blocks = pl.cdiv(B, TB)
    G0 = 2 if num_blocks >= 2 else 1        # "core" axis: lets v7x use 2 TCs
    G1 = pl.cdiv(num_blocks, G0)            # sequential blocks per core slice

    x3d = pred_mask_logits.reshape(B, C, HW)
    kernel = _make_gather_sigmoid_kernel(B, TB, G1, num_blocks)

    def out_map(c0, j, cls_ref):
        # Clamp: if G0*G1 > num_blocks the overhang step rewrites the last
        # block with identical values (harmless, never crosses core slices).
        return (jnp.minimum(c0 * G1 + j, num_blocks - 1), 0)

    probs = pl.pallas_call(
        kernel,
        out_shape=jax.ShapeDtypeStruct((B, HW), out_dtype),
        grid_spec=pltpu.PrefetchScalarGridSpec(
            num_scalar_prefetch=1,
            grid=(G0, G1),
            in_specs=[pl.BlockSpec(memory_space=pl.ANY)],
            out_specs=pl.BlockSpec((TB, HW), out_map),
            scratch_shapes=[
                pltpu.VMEM((2, TB, HW), in_dtype),   # double-buffered gather
                pltpu.SemaphoreType.DMA((2,)),       # one sem per slot
            ],
        ),
        compiler_params=pltpu.CompilerParams(
            # Cross-step double-buffer state lives along axis 1, so it must
            # stay sequential ("arbitrary"); axis 0 is core-shardable.
            dimension_semantics=("parallel", "arbitrary")),
        cost_estimate=pl.CostEstimate(
            flops=0,
            transcendentals=B * HW,
            bytes_accessed=B * HW * (isize + osize) + B * 4),
    )(cls, x3d)
    return probs.reshape(B, 1, Hm, Wm)


class BaseMaskRCNNHeadPallas:
    """JAX/Pallas port of detectron2 BaseMaskRCNNHead (inference path)."""

    def __init__(self, *, loss_weight: float = 1.0, vis_period: int = 0):
        self.loss_weight = loss_weight
        self.vis_period = vis_period

    def layers(self, x):
        # TODO(synk): abstract in the base class (raises NotImplementedError in
        # PyTorch); concrete subclasses add a conv tower here.
        return x

    def forward(self, x, instances):
        """
        Args:
            x: pred mask logits, (B_total, C, Hm, Wm) float array (NCHW).
            instances: list (one per image) of dicts with an int "pred_classes"
                       array; total length over the list equals B_total.
        Returns:
            instances, with a new "pred_masks" field of shape (Ni, 1, Hm, Wm).
        """
        x = self.layers(x)
        pred_classes = jnp.concatenate(
            [inst["pred_classes"] for inst in instances], axis=0)
        probs = mask_rcnn_inference_pallas(x, pred_classes)

        # Split per image (mirrors mask_probs_pred.split(num_boxes_per_image)).
        offset = 0
        for inst in instances:
            n = int(inst["pred_classes"].shape[0])
            inst["pred_masks"] = probs[offset:offset + n]
            offset += n
        return instances


if __name__ == "__main__":
    key = jax.random.PRNGKey(0)
    k_logits, k_cls, k_ag, k_big, k_bigc = jax.random.split(key, 5)

    # --- Small class-specific case: 2 images x 3 boxes, C=4, 16x16 masks. ---
    B_total, C, Hm, Wm = 6, 4, 16, 16
    pred_mask_logits = jax.random.normal(
        k_logits, (B_total, C, Hm, Wm), dtype=jnp.float32)
    all_classes = jax.random.randint(k_cls, (B_total,), 0, C, dtype=jnp.int32)

    instances = [
        {"pred_classes": all_classes[:3]},
        {"pred_classes": all_classes[3:]},
    ]

    head = BaseMaskRCNNHeadPallas(loss_weight=1.0, vis_period=0)
    out_instances = head.forward(pred_mask_logits, instances)

    pred_masks = jnp.concatenate(
        [inst["pred_masks"] for inst in out_instances], axis=0)
    jax.block_until_ready(pred_masks)

    ref = jax.nn.sigmoid(
        pred_mask_logits[jnp.arange(B_total), all_classes][:, None])
    assert pred_masks.shape == (B_total, 1, Hm, Wm)
    assert jnp.allclose(pred_masks, ref, atol=1e-6, rtol=1e-6)

    # --- Multi-block case exercising the double-buffered gather pipeline
    #     (num_blocks=3 -> 2-level grid, prefetch, clamped tail/overhang). ---
    Bb, Cb = 20, 3
    big_logits = jax.random.normal(k_big, (Bb, Cb, Hm, Wm), dtype=jnp.float32)
    big_cls = jax.random.randint(k_bigc, (Bb,), 0, Cb, dtype=jnp.int32)
    big_out = mask_rcnn_inference_pallas(big_logits, big_cls)
    jax.block_until_ready(big_out)
    big_ref = jax.nn.sigmoid(big_logits[jnp.arange(Bb), big_cls][:, None])
    assert big_out.shape == (Bb, 1, Hm, Wm)
    assert jnp.allclose(big_out, big_ref, atol=1e-6, rtol=1e-6)

    # --- Class-agnostic path (C == 1). ---
    ag_logits = jax.random.normal(k_ag, (B_total, 1, Hm, Wm), dtype=jnp.float32)
    ag_out = mask_rcnn_inference_pallas(ag_logits, all_classes)
    jax.block_until_ready(ag_out)
    assert ag_out.shape == (B_total, 1, Hm, Wm)
    assert jnp.allclose(ag_out, jax.nn.sigmoid(ag_logits), atol=1e-6, rtol=1e-6)

    print("KERNEL_OK")
</pallas_src>

<mosaic_0001>
module attributes {stable_mosaic.version = 11 : i64} {
  func.func @kernel(%arg0: i32, %arg1: i32, %arg2: memref<6xi32, #tpu.memory_space<smem>>, %arg3: memref<6x4x256xf32, #tpu.memory_space<any>>, %arg4: memref<6x256xf32, #tpu.memory_space<vmem>>, %arg5: memref<2x6x256xf32, #tpu.memory_space<vmem>>, %arg6: memref<2x!tpu.dma_semaphore, #tpu.memory_space<semaphore_mem>>) attributes {dimension_semantics = [#tpu.dimension_semantics<parallel>, #tpu.dimension_semantics<arbitrary>], iteration_bounds = array<i64: 1, 1>, scalar_prefetch = 1 : i64, scratch_operands = 2 : i64, tpu.core_type = #tpu.core_type<tc>, window_params = [{}, {transform_indices = @transform_1, window_bounds = array<i64: 6, 256>}]} {
    %c1_i32 = arith.constant 1 : i32
    %0 = arith.muli %arg0, %c1_i32 : i32
    %1 = arith.addi %0, %arg1 : i32
    %c0_i32 = arith.constant 0 : i32
    %2 = arith.minsi %1, %c0_i32 : i32
    %c2_i32 = arith.constant 2 : i32
    %c0_i32_0 = arith.constant 0 : i32
    %3 = arith.cmpi eq, %c2_i32, %c0_i32_0 : i32
    %c1_i32_1 = arith.constant 1 : i32
    %4 = arith.select %3, %c1_i32_1, %c2_i32 : i32
    %5 = arith.remsi %arg1, %4 : i32
    %c0_i32_2 = arith.constant 0 : i32
    %6 = arith.cmpi ne, %5, %c0_i32_2 : i32
    %c0_i32_3 = arith.constant 0 : i32
    %7 = arith.cmpi slt, %5, %c0_i32_3 : i32
    %c0_i32_4 = arith.constant 0 : i32
    %8 = arith.cmpi slt, %4, %c0_i32_4 : i32
    %9 = arith.xori %7, %8 : i1
    %10 = arith.andi %9, %6 : i1
    %11 = arith.addi %5, %4 : i32
    %12 = arith.select %10, %11, %5 : i32
    %c0_i32_5 = arith.constant 0 : i32
    %13 = arith.cmpi eq, %arg1, %c0_i32_5 : i32
    %14 = arith.extui %13 : i1 to i32
    %c0_i32_6 = arith.constant 0 : i32
    %15 = arith.cmpi ne, %14, %c0_i32_6 : i32
    scf.if %15 {
      %c6_i32_45 = arith.constant 6 : i32
      %95 = arith.muli %2, %c6_i32_45 : i32
      %c0_i32_46 = arith.constant 0 : i32
      %96 = arith.addi %95, %c0_i32_46 : i32
      %c5_i32_47 = arith.constant 5 : i32
      %97 = arith.minsi %96, %c5_i32_47 : i32
      %98 = arith.index_cast %97 : i32 to index
      %99 = memref.load %arg2[%98] : memref<6xi32, #tpu.memory_space<smem>>
      %c6_i32_48 = arith.constant 6 : i32
      %100 = arith.muli %2, %c6_i32_48 : i32
      %c1_i32_49 = arith.constant 1 : i32
      %101 = arith.addi %100, %c1_i32_49 : i32
      %c5_i32_50 = arith.constant 5 : i32
      %102 = arith.minsi %101, %c5_i32_50 : i32
      %103 = arith.index_cast %102 : i32 to index
      %104 = memref.load %arg2[%103] : memref<6xi32, #tpu.memory_space<smem>>
      %c6_i32_51 = arith.constant 6 : i32
      %105 = arith.muli %2, %c6_i32_51 : i32
      %c2_i32_52 = arith.constant 2 : i32
      %106 = arith.addi %105, %c2_i32_52 : i32
      %c5_i32_53 = arith.constant 5 : i32
      %107 = arith.minsi %106, %c5_i32_53 : i32
      %108 = arith.index_cast %107 : i32 to index
      %109 = memref.load %arg2[%108] : memref<6xi32, #tpu.memory_space<smem>>
      %c6_i32_54 = arith.constant 6 : i32
      %110 = arith.muli %2, %c6_i32_54 : i32
      %c3_i32_55 = arith.constant 3 : i32
      %111 = arith.addi %110, %c3_i32_55 : i32
      %c5_i32_56 = arith.constant 5 : i32
      %112 = arith.minsi %111, %c5_i32_56 : i32
      %113 = arith.index_cast %112 : i32 to index
      %114 = memref.load %arg2[%113] : memref<6xi32, #tpu.memory_space<smem>>
      %c6_i32_57 = arith.constant 6 : i32
      %115 = arith.muli %2, %c6_i32_57 : i32
      %c4_i32_58 = arith.constant 4 : i32
      %116 = arith.addi %115, %c4_i32_58 : i32
      %c5_i32_59 = arith.constant 5 : i32
      %117 = arith.minsi %116, %c5_i32_59 : i32
      %118 = arith.index_cast %117 : i32 to index
      %119 = memref.load %arg2[%118] : memref<6xi32, #tpu.memory_space<smem>>
      %c6_i32_60 = arith.constant 6 : i32
      %120 = arith.muli %2, %c6_i32_60 : i32
      %c5_i32_61 = arith.constant 5 : i32
      %121 = arith.addi %120, %c5_i32_61 : i32
      %c5_i32_62 = arith.constant 5 : i32
      %122 = arith.minsi %121, %c5_i32_62 : i32
      %123 = arith.index_cast %122 : i32 to index
      %124 = memref.load %arg2[%123] : memref<6xi32, #tpu.memory_space<smem>>
      %c0_i32_63 = arith.constant 0 : i32
      %125 = tpu.memref_slice %arg3[%97, %99, %c0_i32_63] : memref<6x4x256xf32, #tpu.memory_space<any>> -> memref<1x1x256xf32, #tpu.memory_space<any>>
      %126 = tpu.memref_squeeze %125 : memref<1x1x256xf32, #tpu.memory_space<any>> -> memref<1x256xf32, #tpu.memory_space<any>>
      %c0_i32_64 = arith.constant 0 : i32
      %c0_i32_65 = arith.constant 0 : i32
      %127 = tpu.memref_slice %arg5[%12, %c0_i32_64, %c0_i32_65] : memref<2x6x256xf32, #tpu.memory_space<vmem>> -> memref<1x1x256xf32, #tpu.memory_space<vmem>>
      %128 = tpu.memref_squeeze %127 : memref<1x1x256xf32, #tpu.memory_space<vmem>> -> memref<1x256xf32, #tpu.memory_space<vmem>>
      %129 = tpu.memref_slice %arg6[%12] : memref<2x!tpu.dma_semaphore, #tpu.memory_space<semaphore_mem>> -> memref<1x!tpu.dma_semaphore, #tpu.memory_space<semaphore_mem>>
      %130 = tpu.memref_squeeze %129 : memref<1x!tpu.dma_semaphore, #tpu.memory_space<semaphore_mem>> -> memref<!tpu.dma_semaphore, #tpu.memory_space<semaphore_mem>>
      tpu.enqueue_dma source(%126 : memref<1x256xf32, #tpu.memory_space<any>>) target(%128 : memref<1x256xf32, #tpu.memory_space<vmem>>) target_semaphore(%130 : memref<!tpu.dma_semaphore, #tpu.memory_space<semaphore_mem>>)
      %c0_i32_66 = arith.constant 0 : i32
      %131 = tpu.memref_slice %arg3[%102, %104, %c0_i32_66] : memref<6x4x256xf32, #tpu.memory_space<any>> -> memref<1x1x256xf32, #tpu.memory_space<any>>
      %132 = tpu.memref_squeeze %131 : memref<1x1x256xf32, #tpu.memory_space<any>> -> memref<1x256xf32, #tpu.memory_space<any>>
      %c1_i32_67 = arith.constant 1 : i32
      %c0_i32_68 = arith.constant 0 : i32
      %133 = tpu.memref_slice %arg5[%12, %c1_i32_67, %c0_i32_68] : memref<2x6x256xf32, #tpu.memory_space<vmem>> -> memref<1x1x256xf32, #tpu.memory_space<vmem>>
      %134 = tpu.memref_squeeze %133 : memref<1x1x256xf32, #tpu.memory_space<vmem>> -> memref<1x256xf32, #tpu.memory_space<vmem>>
      %135 = tpu.memref_slice %arg6[%12] : memref<2x!tpu.dma_semaphore, #tpu.memory_space<semaphore_mem>> -> memref<1x!tpu.dma_semaphore, #tpu.memory_space<semaphore_mem>>
      %136 = tpu.memref_squeeze %135 : memref<1x!tpu.dma_semaphore, #tpu.memory_space<semaphore_mem>> -> memref<!tpu.dma_semaphore, #tpu.memory_space<semaphore_mem>>
      tpu.enqueue_dma source(%132 : memref<1x256xf32, #tpu.memory_space<any>>) target(%134 : memref<1x256xf32, #tpu.memory_space<vmem>>) target_semaphore(%136 : memref<!tpu.dma_semaphore, #tpu.memory_space<semaphore_mem>>)
      %c0_i32_69 = arith.constant 0 : i32
      %137 = tpu.memref_slice %arg3[%107, %109, %c0_i32_69] : memref<6x4x256xf32, #tpu.memory_space<any>> -> memref<1x1x256xf32, #tpu.memory_space<any>>
      %138 = tpu.memref_squeeze %137 : memref<1x1x256xf32, #tpu.memory_space<any>> -> memref<1x256xf32, #tpu.memory_space<any>>
      %c2_i32_70 = arith.constant 2 : i32
      %c0_i32_71 = arith.constant 0 : i32
      %139 = tpu.memref_slice %arg5[%12, %c2_i32_70, %c0_i32_71] : memref<2x6x256xf32, #tpu.memory_space<vmem>> -> memref<1x1x256xf32, #tpu.memory_space<vmem>>
      %140 = tpu.memref_squeeze %139 : memref<1x1x256xf32, #tpu.memory_space<vmem>> -> memref<1x256xf32, #tpu.memory_space<vmem>>
      %141 = tpu.memref_slice %arg6[%12] : memref<2x!tpu.dma_semaphore, #tpu.memory_space<semaphore_mem>> -> memref<1x!tpu.dma_semaphore, #tpu.memory_space<semaphore_mem>>
      %142 = tpu.memref_squeeze %141 : memref<1x!tpu.dma_semaphore, #tpu.memory_space<semaphore_mem>> -> memref<!tpu.dma_semaphore, #tpu.memory_space<semaphore_mem>>
      tpu.enqueue_dma source(%138 : memref<1x256xf32, #tpu.memory_space<any>>) target(%140 : memref<1x256xf32, #tpu.memory_space<vmem>>) target_semaphore(%142 : memref<!tpu.dma_semaphore, #tpu.memory_space<semaphore_mem>>)
      %c0_i32_72 = arith.constant 0 : i32
      %143 = tpu.memref_slice %arg3[%112, %114, %c0_i32_72] : memref<6x4x256xf32, #tpu.memory_space<any>> -> memref<1x1x256xf32, #tpu.memory_space<any>>
      %144 = tpu.memref_squeeze %143 : memref<1x1x256xf32, #tpu.memory_space<any>> -> memref<1x256xf32, #tpu.memory_space<any>>
      %c3_i32_73 = arith.constant 3 : i32
      %c0_i32_74 = arith.constant 0 : i32
      %145 = tpu.memref_slice %arg5[%12, %c3_i32_73, %c0_i32_74] : memref<2x6x256xf32, #tpu.memory_space<vmem>> -> memref<1x1x256xf32, #tpu.memory_space<vmem>>
      %146 = tpu.memref_squeeze %145 : memref<1x1x256xf32, #tpu.memory_space<vmem>> -> memref<1x256xf32, #tpu.memory_space<vmem>>
      %147 = tpu.memref_slice %arg6[%12] : memref<2x!tpu.dma_semaphore, #tpu.memory_space<semaphore_mem>> -> memref<1x!tpu.dma_semaphore, #tpu.memory_space<semaphore_mem>>
      %148 = tpu.memref_squeeze %147 : memref<1x!tpu.dma_semaphore, #tpu.memory_space<semaphore_mem>> -> memref<!tpu.dma_semaphore, #tpu.memory_space<semaphore_mem>>
      tpu.enqueue_dma source(%144 : memref<1x256xf32, #tpu.memory_space<any>>) target(%146 : memref<1x256xf32, #tpu.memory_space<vmem>>) target_semaphore(%148 : memref<!tpu.dma_semaphore, #tpu.memory_space<semaphore_mem>>)
      %c0_i32_75 = arith.constant 0 : i32
      %149 = tpu.memref_slice %arg3[%117, %119, %c0_i32_75] : memref<6x4x256xf32, #tpu.memory_space<any>> -> memref<1x1x256xf32, #tpu.memory_space<any>>
      %150 = tpu.memref_squeeze %149 : memref<1x1x256xf32, #tpu.memory_space<any>> -> memref<1x256xf32, #tpu.memory_space<any>>
      %c4_i32_76 = arith.constant 4 : i32
      %c0_i32_77 = arith.constant 0 : i32
      %151 = tpu.memref_slice %arg5[%12, %c4_i32_76, %c0_i32_77] : memref<2x6x256xf32, #tpu.memory_space<vmem>> -> memref<1x1x256xf32, #tpu.memory_space<vmem>>
      %152 = tpu.memref_squeeze %151 : memref<1x1x256xf32, #tpu.memory_space<vmem>> -> memref<1x256xf32, #tpu.memory_space<vmem>>
      %153 = tpu.memref_slice %arg6[%12] : memref<2x!tpu.dma_semaphore, #tpu.memory_space<semaphore_mem>> -> memref<1x!tpu.dma_semaphore, #tpu.memory_space<semaphore_mem>>
      %154 = tpu.memref_squeeze %153 : memref<1x!tpu.dma_semaphore, #tpu.memory_space<semaphore_mem>> -> memref<!tpu.dma_semaphore, #tpu.memory_space<semaphore_mem>>
      tpu.enqueue_dma source(%150 : memref<1x256xf32, #tpu.memory_space<any>>) target(%152 : memref<1x256xf32, #tpu.memory_space<vmem>>) target_semaphore(%154 : memref<!tpu.dma_semaphore, #tpu.memory_space<semaphore_mem>>)
      %c0_i32_78 = arith.constant 0 : i32
      %155 = tpu.memref_slice %arg3[%122, %124, %c0_i32_78] : memref<6x4x256xf32, #tpu.memory_space<any>> -> memref<1x1x256xf32, #tpu.memory_space<any>>
      %156 = tpu.memref_squeeze %155 : memref<1x1x256xf32, #tpu.memory_space<any>> -> memref<1x256xf32, #tpu.memory_space<any>>
      %c5_i32_79 = arith.constant 5 : i32
      %c0_i32_80 = arith.constant 0 : i32
      %157 = tpu.memref_slice %arg5[%12, %c5_i32_79, %c0_i32_80] : memref<2x6x256xf32, #tpu.memory_space<vmem>> -> memref<1x1x256xf32, #tpu.memory_space<vmem>>
      %158 = tpu.memref_squeeze %157 : memref<1x1x256xf32, #tpu.memory_space<vmem>> -> memref<1x256xf32, #tpu.memory_space<vmem>>
      %159 = tpu.memref_slice %arg6[%12] : memref<2x!tpu.dma_semaphore, #tpu.memory_space<semaphore_mem>> -> memref<1x!tpu.dma_semaphore, #tpu.memory_space<semaphore_mem>>
      %160 = tpu.memref_squeeze %159 : memref<1x!tpu.dma_semaphore, #tpu.memory_space<semaphore_mem>> -> memref<!tpu.dma_semaphore, #tpu.memory_space<semaphore_mem>>
      tpu.enqueue_dma source(%156 : memref<1x256xf32, #tpu.memory_space<any>>) target(%158 : memref<1x256xf32, #tpu.memory_space<vmem>>) target_semaphore(%160 : memref<!tpu.dma_semaphore, #tpu.memory_space<semaphore_mem>>)
    } else {
    }
    %c1_i32_7 = arith.constant 1 : i32
    %16 = arith.addi %arg1, %c1_i32_7 : i32
    %c1_i32_8 = arith.constant 1 : i32
    %17 = arith.cmpi slt, %16, %c1_i32_8 : i32
    %18 = arith.extui %17 : i1 to i32
    %c0_i32_9 = arith.constant 0 : i32
    %19 = arith.cmpi ne, %18, %c0_i32_9 : i32
    scf.if %19 {
      %c1_i32_45 = arith.constant 1 : i32
      %95 = arith.muli %arg0, %c1_i32_45 : i32
      %96 = arith.addi %95, %arg1 : i32
      %c1_i32_46 = arith.constant 1 : i32
      %97 = arith.addi %96, %c1_i32_46 : i32
      %c0_i32_47 = arith.constant 0 : i32
      %98 = arith.minsi %97, %c0_i32_47 : i32
      %c1_i32_48 = arith.constant 1 : i32
      %99 = arith.subi %c1_i32_48, %12 : i32
      %c6_i32_49 = arith.constant 6 : i32
      %100 = arith.muli %98, %c6_i32_49 : i32
      %c0_i32_50 = arith.constant 0 : i32
      %101 = arith.addi %100, %c0_i32_50 : i32
      %c5_i32_51 = arith.constant 5 : i32
      %102 = arith.minsi %101, %c5_i32_51 : i32
      %103 = arith.index_cast %102 : i32 to index
      %104 = memref.load %arg2[%103] : memref<6xi32, #tpu.memory_space<smem>>
      %c6_i32_52 = arith.constant 6 : i32
      %105 = arith.muli %98, %c6_i32_52 : i32
      %c1_i32_53 = arith.constant 1 : i32
      %106 = arith.addi %105, %c1_i32_53 : i32
      %c5_i32_54 = arith.constant 5 : i32
      %107 = arith.minsi %106, %c5_i32_54 : i32
      %108 = arith.index_cast %107 : i32 to index
      %109 = memref.load %arg2[%108] : memref<6xi32, #tpu.memory_space<smem>>
      %c6_i32_55 = arith.constant 6 : i32
      %110 = arith.muli %98, %c6_i32_55 : i32
      %c2_i32_56 = arith.constant 2 : i32
      %111 = arith.addi %110, %c2_i32_56 : i32
      %c5_i32_57 = arith.constant 5 : i32
      %112 = arith.minsi %111, %c5_i32_57 : i32
      %113 = arith.index_cast %112 : i32 to index
      %114 = memref.load %arg2[%113] : memref<6xi32, #tpu.memory_space<smem>>
      %c6_i32_58 = arith.constant 6 : i32
      %115 = arith.muli %98, %c6_i32_58 : i32
      %c3_i32_59 = arith.constant 3 : i32
      %116 = arith.addi %115, %c3_i32_59 : i32
      %c5_i32_60 = arith.constant 5 : i32
      %117 = arith.minsi %116, %c5_i32_60 : i32
      %118 = arith.index_cast %117 : i32 to index
      %119 = memref.load %arg2[%118] : memref<6xi32, #tpu.memory_space<smem>>
      %c6_i32_61 = arith.constant 6 : i32
      %120 = arith.muli %98, %c6_i32_61 : i32
      %c4_i32_62 = arith.constant 4 : i32
      %121 = arith.addi %120, %c4_i32_62 : i32
      %c5_i32_63 = arith.constant 5 : i32
      %122 = arith.minsi %121, %c5_i32_63 : i32
      %123 = arith.index_cast %122 : i32 to index
      %124 = memref.load %arg2[%123] : memref<6xi32, #tpu.memory_space<smem>>
      %c6_i32_64 = arith.constant 6 : i32
      %125 = arith.muli %98, %c6_i32_64 : i32
      %c5_i32_65 = arith.constant 5 : i32
      %126 = arith.addi %125, %c5_i32_65 : i32
      %c5_i32_66 = arith.constant 5 : i32
      %127 = arith.minsi %126, %c5_i32_66 : i32
      %128 = arith.index_cast %127 : i32 to index
      %129 = memref.load %arg2[%128] : memref<6xi32, #tpu.memory_space<smem>>
      %c0_i32_67 = arith.constant 0 : i32
      %130 = tpu.memref_slice %arg3[%102, %104, %c0_i32_67] : memref<6x4x256xf32, #tpu.memory_space<any>> -> memref<1x1x256xf32, #tpu.memory_space<any>>
      %131 = tpu.memref_squeeze %130 : memref<1x1x256xf32, #tpu.memory_space<any>> -> memref<1x256xf32, #tpu.memory_space<any>>
      %c0_i32_68 = arith.constant 0 : i32
      %c0_i32_69 = arith.constant 0 : i32
      %132 = tpu.memref_slice %arg5[%99, %c0_i32_68, %c0_i32_69] : memref<2x6x256xf32, #tpu.memory_space<vmem>> -> memref<1x1x256xf32, #tpu.memory_space<vmem>>
      %133 = tpu.memref_squeeze %132 : memref<1x1x256xf32, #tpu.memory_space<vmem>> -> memref<1x256xf32, #tpu.memory_space<vmem>>
      %134 = tpu.memref_slice %arg6[%99] : memref<2x!tpu.dma_semaphore, #tpu.memory_space<semaphore_mem>> -> memref<1x!tpu.dma_semaphore, #tpu.memory_space<semaphore_mem>>
      %135 = tpu.memref_squeeze %134 : memref<1x!tpu.dma_semaphore, #tpu.memory_space<semaphore_mem>> -> memref<!tpu.dma_semaphore, #tpu.memory_space<semaphore_mem>>
      tpu.enqueue_dma source(%131 : memref<1x256xf32, #tpu.memory_space<any>>) target(%133 : memref<1x256xf32, #tpu.memory_space<vmem>>) target_semaphore(%135 : memref<!tpu.dma_semaphore, #tpu.memory_space<semaphore_mem>>)
      %c0_i32_70 = arith.constant 0 : i32
      %136 = tpu.memref_slice %arg3[%107, %109, %c0_i32_70] : memref<6x4x256xf32, #tpu.memory_space<any>> -> memref<1x1x256xf32, #tpu.memory_space<any>>
      %137 = tpu.memref_squeeze %136 : memref<1x1x256xf32, #tpu.memory_space<any>> -> memref<1x256xf32, #tpu.memory_space<any>>
      %c1_i32_71 = arith.constant 1 : i32
      %c0_i32_72 = arith.constant 0 : i32
      %138 = tpu.memref_slice %arg5[%99, %c1_i32_71, %c0_i32_72] : memref<2x6x256xf32, #tpu.memory_space<vmem>> -> memref<1x1x256xf32, #tpu.memory_space<vmem>>
      %139 = tpu.memref_squeeze %138 : memref<1x1x256xf32, #tpu.memory_space<vmem>> -> memref<1x256xf32, #tpu.memory_space<vmem>>
      %140 = tpu.memref_slice %arg6[%99] : memref<2x!tpu.dma_semaphore, #tpu.memory_space<semaphore_mem>> -> memref<1x!tpu.dma_semaphore, #tpu.memory_space<semaphore_mem>>
      %141 = tpu.memref_squeeze %140 : memref<1x!tpu.dma_semaphore, #tpu.memory_space<semaphore_mem>> -> memref<!tpu.dma_semaphore, #tpu.memory_space<semaphore_mem>>
      tpu.enqueue_dma source(%137 : memref<1x256xf32, #tpu.memory_space<any>>) target(%139 : memref<1x256xf32, #tpu.memory_space<vmem>>) target_semaphore(%141 : memref<!tpu.dma_semaphore, #tpu.memory_space<semaphore_mem>>)
      %c0_i32_73 = arith.constant 0 : i32
      %142 = tpu.memref_slice %arg3[%112, %114, %c0_i32_73] : memref<6x4x256xf32, #tpu.memory_space<any>> -> memref<1x1x256xf32, #tpu.memory_space<any>>
      %143 = tpu.memref_squeeze %142 : memref<1x1x256xf32, #tpu.memory_space<any>> -> memref<1x256xf32, #tpu.memory_space<any>>
      %c2_i32_74 = arith.constant 2 : i32
      %c0_i32_75 = arith.constant 0 : i32
      %144 = tpu.memref_slice %arg5[%99, %c2_i32_74, %c0_i32_75] : memref<2x6x256xf32, #tpu.memory_space<vmem>> -> memref<1x1x256xf32, #tpu.memory_space<vmem>>
      %145 = tpu.memref_squeeze %144 : memref<1x1x256xf32, #tpu.memory_space<vmem>> -> memref<1x256xf32, #tpu.memory_space<vmem>>
      %146 = tpu.memref_slice %arg6[%99] : memref<2x!tpu.dma_semaphore, #tpu.memory_space<semaphore_mem>> -> memref<1x!tpu.dma_semaphore, #tpu.memory_space<semaphore_mem>>
      %147 = tpu.memref_squeeze %146 : memref<1x!tpu.dma_semaphore, #tpu.memory_space<semaphore_mem>> -> memref<!tpu.dma_semaphore, #tpu.memory_space<semaphore_mem>>
      tpu.enqueue_dma source(%143 : memref<1x256xf32, #tpu.memory_space<any>>) target(%145 : memref<1x256xf32, #tpu.memory_space<vmem>>) target_semaphore(%147 : memref<!tpu.dma_semaphore, #tpu.memory_space<semaphore_mem>>)
      %c0_i32_76 = arith.constant 0 : i32
      %148 = tpu.memref_slice %arg3[%117, %119, %c0_i32_76] : memref<6x4x256xf32, #tpu.memory_space<any>> -> memref<1x1x256xf32, #tpu.memory_space<any>>
      %149 = tpu.memref_squeeze %148 : memref<1x1x256xf32, #tpu.memory_space<any>> -> memref<1x256xf32, #tpu.memory_space<any>>
      %c3_i32_77 = arith.constant 3 : i32
      %c0_i32_78 = arith.constant 0 : i32
      %150 = tpu.memref_slice %arg5[%99, %c3_i32_77, %c0_i32_78] : memref<2x6x256xf32, #tpu.memory_space<vmem>> -> memref<1x1x256xf32, #tpu.memory_space<vmem>>
      %151 = tpu.memref_squeeze %150 : memref<1x1x256xf32, #tpu.memory_space<vmem>> -> memref<1x256xf32, #tpu.memory_space<vmem>>
      %152 = tpu.memref_slice %arg6[%99] : memref<2x!tpu.dma_semaphore, #tpu.memory_space<semaphore_mem>> -> memref<1x!tpu.dma_semaphore, #tpu.memory_space<semaphore_mem>>
      %153 = tpu.memref_squeeze %152 : memref<1x!tpu.dma_semaphore, #tpu.memory_space<semaphore_mem>> -> memref<!tpu.dma_semaphore, #tpu.memory_space<semaphore_mem>>
      tpu.enqueue_dma source(%149 : memref<1x256xf32, #tpu.memory_space<any>>) target(%151 : memref<1x256xf32, #tpu.memory_space<vmem>>) target_semaphore(%153 : memref<!tpu.dma_semaphore, #tpu.memory_space<semaphore_mem>>)
      %c0_i32_79 = arith.constant 0 : i32
      %154 = tpu.memref_slice %arg3[%122, %124, %c0_i32_79] : memref<6x4x256xf32, #tpu.memory_space<any>> -> memref<1x1x256xf32, #tpu.memory_space<any>>
      %155 = tpu.memref_squeeze %154 : memref<1x1x256xf32, #tpu.memory_space<any>> -> memref<1x256xf32, #tpu.memory_space<any>>
      %c4_i32_80 = arith.constant 4 : i32
      %c0_i32_81 = arith.constant 0 : i32
      %156 = tpu.memref_slice %arg5[%99, %c4_i32_80, %c0_i32_81] : memref<2x6x256xf32, #tpu.memory_space<vmem>> -> memref<1x1x256xf32, #tpu.memory_space<vmem>>
      %157 = tpu.memref_squeeze %156 : memref<1x1x256xf32, #tpu.memory_space<vmem>> -> memref<1x256xf32, #tpu.memory_space<vmem>>
      %158 = tpu.memref_slice %arg6[%99] : memref<2x!tpu.dma_semaphore, #tpu.memory_space<semaphore_mem>> -> memref<1x!tpu.dma_semaphore, #tpu.memory_space<semaphore_mem>>
      %159 = tpu.memref_squeeze %158 : memref<1x!tpu.dma_semaphore, #tpu.memory_space<semaphore_mem>> -> memref<!tpu.dma_semaphore, #tpu.memory_space<semaphore_mem>>
      tpu.enqueue_dma source(%155 : memref<1x256xf32, #tpu.memory_space<any>>) target(%157 : memref<1x256xf32, #tpu.memory_space<vmem>>) target_semaphore(%159 : memref<!tpu.dma_semaphore, #tpu.memory_space<semaphore_mem>>)
      %c0_i32_82 = arith.constant 0 : i32
      %160 = tpu.memref_slice %arg3[%127, %129, %c0_i32_82] : memref<6x4x256xf32, #tpu.memory_space<any>> -> memref<1x1x256xf32, #tpu.memory_space<any>>
      %161 = tpu.memref_squeeze %160 : memref<1x1x256xf32, #tpu.memory_space<any>> -> memref<1x256xf32, #tpu.memory_space<any>>
      %c5_i32_83 = arith.constant 5 : i32
      %c0_i32_84 = arith.constant 0 : i32
      %162 = tpu.memref_slice %arg5[%99, %c5_i32_83, %c0_i32_84] : memref<2x6x256xf32, #tpu.memory_space<vmem>> -> memref<1x1x256xf32, #tpu.memory_space<vmem>>
      %163 = tpu.memref_squeeze %162 : memref<1x1x256xf32, #tpu.memory_space<vmem>> -> memref<1x256xf32, #tpu.memory_space<vmem>>
      %164 = tpu.memref_slice %arg6[%99] : memref<2x!tpu.dma_semaphore, #tpu.memory_space<semaphore_mem>> -> memref<1x!tpu.dma_semaphore, #tpu.memory_space<semaphore_mem>>
      %165 = tpu.memref_squeeze %164 : memref<1x!tpu.dma_semaphore, #tpu.memory_space<semaphore_mem>> -> memref<!tpu.dma_semaphore, #tpu.memory_space<semaphore_mem>>
      tpu.enqueue_dma source(%161 : memref<1x256xf32, #tpu.memory_space<any>>) target(%163 : memref<1x256xf32, #tpu.memory_space<vmem>>) target_semaphore(%165 : memref<!tpu.dma_semaphore, #tpu.memory_space<semaphore_mem>>)
    } else {
    }
    %c6_i32 = arith.constant 6 : i32
    %20 = arith.muli %2, %c6_i32 : i32
    %c0_i32_10 = arith.constant 0 : i32
    %21 = arith.addi %20, %c0_i32_10 : i32
    %c5_i32 = arith.constant 5 : i32
    %22 = arith.minsi %21, %c5_i32 : i32
    %23 = arith.index_cast %22 : i32 to index
    %24 = memref.load %arg2[%23] : memref<6xi32, #tpu.memory_space<smem>>
    %c6_i32_11 = arith.constant 6 : i32
    %25 = arith.muli %2, %c6_i32_11 : i32
    %c1_i32_12 = arith.constant 1 : i32
    %26 = arith.addi %25, %c1_i32_12 : i32
    %c5_i32_13 = arith.constant 5 : i32
    %27 = arith.minsi %26, %c5_i32_13 : i32
    %28 = arith.index_cast %27 : i32 to index
    %29 = memref.load %arg2[%28] : memref<6xi32, #tpu.memory_space<smem>>
    %c6_i32_14 = arith.constant 6 : i32
    %30 = arith.muli %2, %c6_i32_14 : i32
    %c2_i32_15 = arith.constant 2 : i32
    %31 = arith.addi %30, %c2_i32_15 : i32
    %c5_i32_16 = arith.constant 5 : i32
    %32 = arith.minsi %31, %c5_i32_16 : i32
    %33 = arith.index_cast %32 : i32 to index
    %34 = memref.load %arg2[%33] : memref<6xi32, #tpu.memory_space<smem>>
    %c6_i32_17 = arith.constant 6 : i32
    %35 = arith.muli %2, %c6_i32_17 : i32
    %c3_i32 = arith.constant 3 : i32
    %36 = arith.addi %35, %c3_i32 : i32
    %c5_i32_18 = arith.constant 5 : i32
    %37 = arith.minsi %36, %c5_i32_18 : i32
    %38 = arith.index_cast %37 : i32 to index
    %39 = memref.load %arg2[%38] : memref<6xi32, #tpu.memory_space<smem>>
    %c6_i32_19 = arith.constant 6 : i32
    %40 = arith.muli %2, %c6_i32_19 : i32
    %c4_i32 = arith.constant 4 : i32
    %41 = arith.addi %40, %c4_i32 : i32
    %c5_i32_20 = arith.constant 5 : i32
    %42 = arith.minsi %41, %c5_i32_20 : i32
    %43 = arith.index_cast %42 : i32 to index
    %44 = memref.load %arg2[%43] : memref<6xi32, #tpu.memory_space<smem>>
    %c6_i32_21 = arith.constant 6 : i32
    %45 = arith.muli %2, %c6_i32_21 : i32
    %c5_i32_22 = arith.constant 5 : i32
    %46 = arith.addi %45, %c5_i32_22 : i32
    %c5_i32_23 = arith.constant 5 : i32
    %47 = arith.minsi %46, %c5_i32_23 : i32
    %48 = arith.index_cast %47 : i32 to index
    %49 = memref.load %arg2[%48] : memref<6xi32, #tpu.memory_space<smem>>
    %c0_i32_24 = arith.constant 0 : i32
    %50 = tpu.memref_slice %arg3[%22, %24, %c0_i32_24] : memref<6x4x256xf32, #tpu.memory_space<any>> -> memref<1x1x256xf32, #tpu.memory_space<any>>
    %51 = tpu.memref_squeeze %50 : memref<1x1x256xf32, #tpu.memory_space<any>> -> memref<1x256xf32, #tpu.memory_space<any>>
    %c0_i32_25 = arith.constant 0 : i32
    %c0_i32_26 = arith.constant 0 : i32
    %52 = tpu.memref_slice %arg5[%12, %c0_i32_25, %c0_i32_26] : memref<2x6x256xf32, #tpu.memory_space<vmem>> -> memref<1x1x256xf32, #tpu.memory_space<vmem>>
    %53 = tpu.memref_squeeze %52 : memref<1x1x256xf32, #tpu.memory_space<vmem>> -> memref<1x256xf32, #tpu.memory_space<vmem>>
    %54 = tpu.memref_slice %arg6[%12] : memref<2x!tpu.dma_semaphore, #tpu.memory_space<semaphore_mem>> -> memref<1x!tpu.dma_semaphore, #tpu.memory_space<semaphore_mem>>
    %55 = tpu.memref_squeeze %54 : memref<1x!tpu.dma_semaphore, #tpu.memory_space<semaphore_mem>> -> memref<!tpu.dma_semaphore, #tpu.memory_space<semaphore_mem>>
    tpu.wait_dma2 semaphore(%55 : memref<!tpu.dma_semaphore, #tpu.memory_space<semaphore_mem>>) src(%51 : memref<1x256xf32, #tpu.memory_space<any>>) dst(%53 : memref<1x256xf32, #tpu.memory_space<vmem>>)
    %c0_i32_27 = arith.constant 0 : i32
    %56 = tpu.memref_slice %arg3[%27, %29, %c0_i32_27] : memref<6x4x256xf32, #tpu.memory_space<any>> -> memref<1x1x256xf32, #tpu.memory_space<any>>
    %57 = tpu.memref_squeeze %56 : memref<1x1x256xf32, #tpu.memory_space<any>> -> memref<1x256xf32, #tpu.memory_space<any>>
    %c1_i32_28 = arith.constant 1 : i32
    %c0_i32_29 = arith.constant 0 : i32
    %58 = tpu.memref_slice %arg5[%12, %c1_i32_28, %c0_i32_29] : memref<2x6x256xf32, #tpu.memory_space<vmem>> -> memref<1x1x256xf32, #tpu.memory_space<vmem>>
    %59 = tpu.memref_squeeze %58 : memref<1x1x256xf32, #tpu.memory_space<vmem>> -> memref<1x256xf32, #tpu.memory_space<vmem>>
    %60 = tpu.memref_slice %arg6[%12] : memref<2x!tpu.dma_semaphore, #tpu.memory_space<semaphore_mem>> -> memref<1x!tpu.dma_semaphore, #tpu.memory_space<semaphore_mem>>
    %61 = tpu.memref_squeeze %60 : memref<1x!tpu.dma_semaphore, #tpu.memory_space<semaphore_mem>> -> memref<!tpu.dma_semaphore, #tpu.memory_space<semaphore_mem>>
    tpu.wait_dma2 semaphore(%61 : memref<!tpu.dma_semaphore, #tpu.memory_space<semaphore_mem>>) src(%57 : memref<1x256xf32, #tpu.memory_space<any>>) dst(%59 : memref<1x256xf32, #tpu.memory_space<vmem>>)
    %c0_i32_30 = arith.constant 0 : i32
    %62 = tpu.memref_slice %arg3[%32, %34, %c0_i32_30] : memref<6x4x256xf32, #tpu.memory_space<any>> -> memref<1x1x256xf32, #tpu.memory_space<any>>
    %63 = tpu.memref_squeeze %62 : memref<1x1x256xf32, #tpu.memory_space<any>> -> memref<1x256xf32, #tpu.memory_space<any>>
    %c2_i32_31 = arith.constant 2 : i32
    %c0_i32_32 = arith.constant 0 : i32
    %64 = tpu.memref_slice %arg5[%12, %c2_i32_31, %c0_i32_32] : memref<2x6x256xf32, #tpu.memory_space<vmem>> -> memref<1x1x256xf32, #tpu.memory_space<vmem>>
    %65 = tpu.memref_squeeze %64 : memref<1x1x256xf32, #tpu.memory_space<vmem>> -> memref<1x256xf32, #tpu.memory_space<vmem>>
    %66 = tpu.memref_slice %arg6[%12] : memref<2x!tpu.dma_semaphore, #tpu.memory_space<semaphore_mem>> -> memref<1x!tpu.dma_semaphore, #tpu.memory_space<semaphore_mem>>
    %67 = tpu.memref_squeeze %66 : memref<1x!tpu.dma_semaphore, #tpu.memory_space<semaphore_mem>> -> memref<!tpu.dma_semaphore, #tpu.memory_space<semaphore_mem>>
    tpu.wait_dma2 semaphore(%67 : memref<!tpu.dma_semaphore, #tpu.memory_space<semaphore_mem>>) src(%63 : memref<1x256xf32, #tpu.memory_space<any>>) dst(%65 : memref<1x256xf32, #tpu.memory_space<vmem>>)
    %c0_i32_33 = arith.constant 0 : i32
    %68 = tpu.memref_slice %arg3[%37, %39, %c0_i32_33] : memref<6x4x256xf32, #tpu.memory_space<any>> -> memref<1x1x256xf32, #tpu.memory_space<any>>
    %69 = tpu.memref_squeeze %68 : memref<1x1x256xf32, #tpu.memory_space<any>> -> memref<1x256xf32, #tpu.memory_space<any>>
    %c3_i32_34 = arith.constant 3 : i32
    %c0_i32_35 = arith.constant 0 : i32
    %70 = tpu.memref_slice %arg5[%12, %c3_i32_34, %c0_i32_35] : memref<2x6x256xf32, #tpu.memory_space<vmem>> -> memref<1x1x256xf32, #tpu.memory_space<vmem>>
    %71 = tpu.memref_squeeze %70 : memref<1x1x256xf32, #tpu.memory_space<vmem>> -> memref<1x256xf32, #tpu.memory_space<vmem>>
    %72 = tpu.memref_slice %arg6[%12] : memref<2x!tpu.dma_semaphore, #tpu.memory_space<semaphore_mem>> -> memref<1x!tpu.dma_semaphore, #tpu.memory_space<semaphore_mem>>
    %73 = tpu.memref_squeeze %72 : memref<1x!tpu.dma_semaphore, #tpu.memory_space<semaphore_mem>> -> memref<!tpu.dma_semaphore, #tpu.memory_space<semaphore_mem>>
    tpu.wait_dma2 semaphore(%73 : memref<!tpu.dma_semaphore, #tpu.memory_space<semaphore_mem>>) src(%69 : memref<1x256xf32, #tpu.memory_space<any>>) dst(%71 : memref<1x256xf32, #tpu.memory_space<vmem>>)
    %c0_i32_36 = arith.constant 0 : i32
    %74 = tpu.memref_slice %arg3[%42, %44, %c0_i32_36] : memref<6x4x256xf32, #tpu.memory_space<any>> -> memref<1x1x256xf32, #tpu.memory_space<any>>
    %75 = tpu.memref_squeeze %74 : memref<1x1x256xf32, #tpu.memory_space<any>> -> memref<1x256xf32, #tpu.memory_space<any>>
    %c4_i32_37 = arith.constant 4 : i32
    %c0_i32_38 = arith.constant 0 : i32
    %76 = tpu.memref_slice %arg5[%12, %c4_i32_37, %c0_i32_38] : memref<2x6x256xf32, #tpu.memory_space<vmem>> -> memref<1x1x256xf32, #tpu.memory_space<vmem>>
    %77 = tpu.memref_squeeze %76 : memref<1x1x256xf32, #tpu.memory_space<vmem>> -> memref<1x256xf32, #tpu.memory_space<vmem>>
    %78 = tpu.memref_slice %arg6[%12] : memref<2x!tpu.dma_semaphore, #tpu.memory_space<semaphore_mem>> -> memref<1x!tpu.dma_semaphore, #tpu.memory_space<semaphore_mem>>
    %79 = tpu.memref_squeeze %78 : memref<1x!tpu.dma_semaphore, #tpu.memory_space<semaphore_mem>> -> memref<!tpu.dma_semaphore, #tpu.memory_space<semaphore_mem>>
    tpu.wait_dma2 semaphore(%79 : memref<!tpu.dma_semaphore, #tpu.memory_space<semaphore_mem>>) src(%75 : memref<1x256xf32, #tpu.memory_space<any>>) dst(%77 : memref<1x256xf32, #tpu.memory_space<vmem>>)
    %c0_i32_39 = arith.constant 0 : i32
    %80 = tpu.memref_slice %arg3[%47, %49, %c0_i32_39] : memref<6x4x256xf32, #tpu.memory_space<any>> -> memref<1x1x256xf32, #tpu.memory_space<any>>
    %81 = tpu.memref_squeeze %80 : memref<1x1x256xf32, #tpu.memory_space<any>> -> memref<1x256xf32, #tpu.memory_space<any>>
    %c5_i32_40 = arith.constant 5 : i32
    %c0_i32_41 = arith.constant 0 : i32
    %82 = tpu.memref_slice %arg5[%12, %c5_i32_40, %c0_i32_41] : memref<2x6x256xf32, #tpu.memory_space<vmem>> -> memref<1x1x256xf32, #tpu.memory_space<vmem>>
    %83 = tpu.memref_squeeze %82 : memref<1x1x256xf32, #tpu.memory_space<vmem>> -> memref<1x256xf32, #tpu.memory_space<vmem>>
    %84 = tpu.memref_slice %arg6[%12] : memref<2x!tpu.dma_semaphore, #tpu.memory_space<semaphore_mem>> -> memref<1x!tpu.dma_semaphore, #tpu.memory_space<semaphore_mem>>
    %85 = tpu.memref_squeeze %84 : memref<1x!tpu.dma_semaphore, #tpu.memory_space<semaphore_mem>> -> memref<!tpu.dma_semaphore, #tpu.memory_space<semaphore_mem>>
    tpu.wait_dma2 semaphore(%85 : memref<!tpu.dma_semaphore, #tpu.memory_space<semaphore_mem>>) src(%81 : memref<1x256xf32, #tpu.memory_space<any>>) dst(%83 : memref<1x256xf32, #tpu.memory_space<vmem>>)
    %86 = arith.index_cast %12 : i32 to index
    %c0 = arith.constant 0 : index
    %c0_42 = arith.constant 0 : index
    %87 = vector.load %arg5[%86, %c0, %c0_42] : memref<2x6x256xf32, #tpu.memory_space<vmem>>, vector<1x6x256xf32>
    %88 = vector.shape_cast %87 : vector<1x6x256xf32> to vector<6x256xf32>
    %89 = arith.negf %88 : vector<6x256xf32>
    %90 = math.exp %89 : vector<6x256xf32>
    %cst = arith.constant 1.000000e+00 : f32
    %91 = vector.broadcast %cst : f32 to vector<6x256xf32>
    %92 = arith.addf %91, %90 : vector<6x256xf32>
    %93 = arith.divf %91, %92 : vector<6x256xf32>
    %c0_43 = arith.constant 0 : index
    %c0_44 = arith.constant 0 : index
    %94 = vector.load %arg4[%c0_43, %c0_44] : memref<6x256xf32, #tpu.memory_space<vmem>>, vector<6x256xf32>
    tpu.vector_store %arg4[%c0_43, %c0_44], %93 {strides = array<i32>} : memref<6x256xf32, #tpu.memory_space<vmem>>, vector<6x256xf32>,
    return
  }
  func.func @transform_1(%arg0: i32, %arg1: i32, %arg2: memref<6xi32, #tpu.memory_space<smem>>) -> (i32, i32) {
    %c1_i32 = arith.constant 1 : i32
    %0 = arith.muli %arg0, %c1_i32 : i32
    %1 = arith.addi %0, %arg1 : i32
    %c0_i32 = arith.constant 0 : i32
    %2 = arith.minsi %1, %c0_i32 : i32
    %c0_i32_0 = arith.constant 0 : i32
    %c0_i32_1 = arith.constant 0 : i32
    return %2, %c0_i32_0 : i32, i32
  }
}

</mosaic_0001>

<llo_original>
// kernel: tpu_custom_call.1
$region0: #{tpu_custom_call.1}
  #allocation0 [shape = 'u32[]', space=smem, size = 0x4, offset = 0x4, fixed_abs, tag = 'smem constant byte address 0x4 - core index']
  #allocation1 [shape = 'u32[144,128]{1,0:T(1,128)}', space=vmem, size = 0x12000, scoped, tag = 'internal scratch']
  #allocation2 [shape = 'f32[2,6,256]{2,1,0:T(8,128)}', space=vmem, size = 0x4000, scoped, tag = 'scratch operand']
  #allocation3 [shape = 's32[2]{0}', space=sflag, size = 0x8, scoped, tag = 'scratch operand']
  #allocation4 [shape = 's32[1]{0}', space=sflag, size = 0x4, scoped, tag = 'scoped memory for tpu_custom_call.1']
  #allocation5 [shape = 'u8[512]{0}', space=smem, size = 0x200, scoped, tag = 'prefetched SMEM operand 0']
  #allocation8 [shape = 's32[]', space=sflag, size = 0x4, offset = 0, fixed_abs, tag = 'sflag constant byte address 0x0 - dummy sync flag']
  #allocation9 [shape = 's32[]', space=sflag, size = 0x4, offset = 0, fixed_abs, tag = 'sflag constant byte address 0x0 - dummy sync flag']
  #allocation10 [shape = 's32[]', space=sflag, size = 0x4, offset = 0, fixed_abs, tag = 'sflag constant byte address 0x0 - dummy sync flag']
  #allocation11 [shape = 's32[]', space=sflag, size = 0x4, offset = 0, fixed_abs, tag = 'sflag constant byte address 0x0 - dummy sync flag']
  #allocation12 [shape = 's32[]', space=sflag, size = 0x4, offset = 0, fixed_abs, tag = 'sflag constant byte address 0x0 - dummy sync flag']
  #allocation13 [shape = 's32[]', space=sflag, size = 0x4, offset = 0, fixed_abs, tag = 'sflag constant byte address 0x0 - dummy sync flag']
  #allocation14 [shape = 's32[]', space=sflag, size = 0x4, offset = 0, fixed_abs, tag = 'sflag constant byte address 0x0 - dummy sync flag']
  #allocation15 [shape = 's32[]', space=sflag, size = 0x4, offset = 0, fixed_abs, tag = 'sflag constant byte address 0x0 - dummy sync flag']
  #allocation16 [shape = 's32[]', space=sflag, size = 0x4, offset = 0, fixed_abs, tag = 'sflag constant byte address 0x0 - dummy sync flag']
  #allocation17 [shape = 's32[]', space=sflag, size = 0x4, offset = 0, fixed_abs, tag = 'sflag constant byte address 0x0 - dummy sync flag']
  #allocation18 [shape = 's32[]', space=sflag, size = 0x4, offset = 0, fixed_abs, tag = 'sflag constant byte address 0x0 - dummy sync flag']
  #allocation19 [shape = 's32[]', space=sflag, size = 0x4, offset = 0, fixed_abs, tag = 'sflag constant byte address 0x0 - dummy sync flag']
  %s0 = inlined_call_operand.hbm [shape: s32[6], index: 0, kind: input, shape index: {}]
  %s1 = inlined_call_operand.hbm [shape: f32[6,4,256], index: 1, kind: input, shape index: {}]
  %s2 = inlined_call_operand.hbm [shape: f32[6,256], index: 2, kind: output, shape index: {}]
  %s3 = sld [smem:[#allocation0]]
  $region18: #{tpu_custom_call.1} parent=0
    _
  %s5 = ssub.s32 1, %s3
  %s6 = scalar_select 0, %s5, %s3
  %8 = dma.hbm_to_smem %s0, 16, [#allocation5], [#allocation4]
  %9 = dma.done [#allocation4], 16
  %10 = sfence
  $region1: #{tpu_custom_call.1} parent=0
    #allocation6 [shape = 'u8[8192]{0}', space=vmem, size = 0x2000, scoped, tag = 'output window, operand 0, single buffered']
    #allocation7 [shape = 's32[1]{0}', space=sflag, size = 0x4, scoped, tag = 'scoped memory for tpu_custom_call.1']
    %11 = vsyncpa [#allocation7], 0
    %s12 = sadd.s32 0, 0
    %p13 = scmp.lt.s32.totalorder %s12, 0
    %s14 = scalar_select %p13, %s12, 0
    %s15 = sadd.s32 0, 0
    %p16 = scmp.lt.s32.totalorder %s15, 0
    %s17 = scalar_select %p16, %s15, 0
    %s18 = ssub.s32 0, 0
    %s19 = ssub.s32 0, 0
    %p20 = scmp.ne.s32.totalorder 0, 0
    %p21 = scmp.lt.s32.totalorder 0, 0
    %p22 = pnand %p21, %p20
    %p23 = pneg %p22
    %s24 = sadd.s32 0, 2
    %s25 = scalar_select %p23, %s24, 0
    %p26 = scmp.eq.s32.totalorder 0, 0
    // Predicated region
    $region2: #{tpu_custom_call.1} parent=1 // pred_check
      %p27 = pneg %p26
    $region3: #{tpu_custom_call.1} parent=1 // pred_check_branch
      %29 = sbr.rel (%p27) target = $region5
    $region4: #{tpu_custom_call.1} parent=1 // pred_region
      %s30 = smul.u32 %s17, 6
      %p31 = scmp.lt.s32.totalorder %s30, 5
      %s32 = scalar_select %p31, %s30, 5
      %s33 = sld [smem:[#allocation5 + %s32]]
      %s34 = sadd.s32 %s30, 1
      %p35 = scmp.lt.s32.totalorder %s34, 5
      %s36 = scalar_select %p35, %s34, 5
      %s37 = sld [smem:[#allocation5 + %s36]]
      %s38 = sadd.s32 %s30, 2
      %p39 = scmp.lt.s32.totalorder %s38, 5
      %s40 = scalar_select %p39, %s38, 5
      %s41 = sld [smem:[#allocation5 + %s40]]
      %s42 = sadd.s32 %s30, 3
      %p43 = scmp.lt.s32.totalorder %s42, 5
      %s44 = scalar_select %p43, %s42, 5
      %s45 = sld [smem:[#allocation5 + %s44]]
      %s46 = sadd.s32 %s30, 4
      %p47 = scmp.lt.s32.totalorder %s46, 5
      %s48 = scalar_select %p47, %s46, 5
      %s49 = sld [smem:[#allocation5 + %s48]]
      %s50 = sadd.s32 %s30, 5
      %p51 = scmp.lt.s32.totalorder %s50, 5
      %s52 = scalar_select %p51, %s50, 5
      %s53 = sld [smem:[#allocation5 + %s52]]
      %s54 = sshrl.u32 %s33, 2
      %s55 = sand.u32 %s33, 3
      %s56 = smul.u32 %s54, 8
      %s57 = sadd.s32 %s55, %s56
      %s58 = smul.u32 %s32, 8
      %s59 = sadd.s32 %s57, %s58
      %s60 = smul.addr %s59, 16
      %s61 = scalar_lea.hbm %s1, %s60
      %s62 = smul.u32 %s25, 16
      %s63 = scalar_lea.vmem [#allocation2], %s62
      %s64 = scalar_lea.sflag [#allocation3], %s25
      %s66 = sshll.u32 %s63, 4
      %s67 = int_to_ptr.vmem [resolvable:$true] %s66
      %69 = dma.hbm_to_vmem [thread:$0]  %s61, 32, %s67, %s64, 64, 128, 1
      %s70 = sshrl.u32 %s37, 2
      %s71 = sand.u32 %s37, 3
      %s72 = smul.u32 %s70, 8
      %s73 = sadd.s32 %s71, %s72
      %s74 = smul.u32 %s36, 8
      %s75 = sadd.s32 %s73, %s74
      %s76 = smul.addr %s75, 16
      %s77 = scalar_lea.hbm %s1, %s76
      %s78 = sadd.s32 1, %s62
      %s79 = scalar_lea.vmem [#allocation2], %s78
      %s81 = sshll.u32 %s79, 4
      %s82 = int_to_ptr.vmem [resolvable:$true] %s81
      %84 = dma.hbm_to_vmem [thread:$0]  %s77, 32, %s82, %s64, 64, 128, 1
      %s85 = sshrl.u32 %s41, 2
      %s86 = sand.u32 %s41, 3
      %s87 = smul.u32 %s85, 8
      %s88 = sadd.s32 %s86, %s87
      %s89 = smul.u32 %s40, 8
      %s90 = sadd.s32 %s88, %s89
      %s91 = smul.addr %s90, 16
      %s92 = scalar_lea.hbm %s1, %s91
      %s93 = sadd.s32 2, %s62
      %s94 = scalar_lea.vmem [#allocation2], %s93
      %s96 = sshll.u32 %s94, 4
      %s97 = int_to_ptr.vmem [resolvable:$true] %s96
      %99 = dma.hbm_to_vmem [thread:$0]  %s92, 32, %s97, %s64, 64, 128, 1
      %s100 = sshrl.u32 %s45, 2
      %s101 = sand.u32 %s45, 3
      %s102 = smul.u32 %s100, 8
      %s103 = sadd.s32 %s101, %s102
      %s104 = smul.u32 %s44, 8
      %s105 = sadd.s32 %s103, %s104
      %s106 = smul.addr %s105, 16
      %s107 = scalar_lea.hbm %s1, %s106
      %s108 = sadd.s32 3, %s62
      %s109 = scalar_lea.vmem [#allocation2], %s108
      %s111 = sshll.u32 %s109, 4
      %s112 = int_to_ptr.vmem [resolvable:$true] %s111
      %114 = dma.hbm_to_vmem [thread:$0]  %s107, 32, %s112, %s64, 64, 128, 1
      %s115 = sshrl.u32 %s49, 2
      %s116 = sand.u32 %s49, 3
      %s117 = smul.u32 %s115, 8
      %s118 = sadd.s32 %s116, %s117
      %s119 = smul.u32 %s48, 8
      %s120 = sadd.s32 %s118, %s119
      %s121 = smul.addr %s120, 16
      %s122 = scalar_lea.hbm %s1, %s121
      %s123 = sadd.s32 4, %s62
      %s124 = scalar_lea.vmem [#allocation2], %s123
      %s126 = sshll.u32 %s124, 4
      %s127 = int_to_ptr.vmem [resolvable:$true] %s126
      %129 = dma.hbm_to_vmem [thread:$0]  %s122, 32, %s127, %s64, 64, 128, 1
      %s130 = sshrl.u32 %s53, 2
      %s131 = sand.u32 %s53, 3
      %s132 = smul.u32 %s130, 8
      %s133 = sadd.s32 %s131, %s132
      %s134 = smul.u32 %s52, 8
      %s135 = sadd.s32 %s133, %s134
      %s136 = smul.addr %s135, 16
      %s137 = scalar_lea.hbm %s1, %s136
      %s138 = sadd.s32 5, %s62
      %s139 = scalar_lea.vmem [#allocation2], %s138
      %s141 = sshll.u32 %s139, 4
      %s142 = int_to_ptr.vmem [resolvable:$true] %s141
      %144 = dma.hbm_to_vmem [thread:$0]  %s137, 32, %s142, %s64, 64, 128, 1
    $region5: #{tpu_custom_call.1} parent=1 // pred_fallthru
      _
    %s145 = sadd.s32 0, 1
    %p146 = scmp.lt.s32.totalorder %s145, 1
    // Predicated region
    $region6: #{tpu_custom_call.1} parent=1 // pred_check
      %p147 = pneg %p146
    $region7: #{tpu_custom_call.1} parent=1 // pred_check_branch
      %149 = sbr.rel (%p147) target = $region9
    $region8: #{tpu_custom_call.1} parent=1 // pred_region
      %s150 = sadd.s32 %s15, 1
      %p151 = scmp.lt.s32.totalorder %s150, 0
      %s152 = scalar_select %p151, %s150, 0
      %s153 = ssub.s32 1, %s25
      %s154 = smul.u32 %s152, 6
      %p155 = scmp.lt.s32.totalorder %s154, 5
      %s156 = scalar_select %p155, %s154, 5
      %s157 = sld [smem:[#allocation5 + %s156]]
      %s158 = sadd.s32 %s154, 1
      %p159 = scmp.lt.s32.totalorder %s158, 5
      %s160 = scalar_select %p159, %s158, 5
      %s161 = sld [smem:[#allocation5 + %s160]]
      %s162 = sadd.s32 %s154, 2
      %p163 = scmp.lt.s32.totalorder %s162, 5
      %s164 = scalar_select %p163, %s162, 5
      %s165 = sld [smem:[#allocation5 + %s164]]
      %s166 = sadd.s32 %s154, 3
      %p167 = scmp.lt.s32.totalorder %s166, 5
      %s168 = scalar_select %p167, %s166, 5
      %s169 = sld [smem:[#allocation5 + %s168]]
      %s170 = sadd.s32 %s154, 4
      %p171 = scmp.lt.s32.totalorder %s170, 5
      %s172 = scalar_select %p171, %s170, 5
      %s173 = sld [smem:[#allocation5 + %s172]]
      %s174 = sadd.s32 %s154, 5
      %p175 = scmp.lt.s32.totalorder %s174, 5
      %s176 = scalar_select %p175, %s174, 5
      %s177 = sld [smem:[#allocation5 + %s176]]
      %s178 = sshrl.u32 %s157, 2
      %s179 = sand.u32 %s157, 3
      %s180 = smul.u32 %s178, 8
      %s181 = sadd.s32 %s179, %s180
      %s182 = smul.u32 %s156, 8
      %s183 = sadd.s32 %s181, %s182
      %s184 = smul.addr %s183, 16
      %s185 = scalar_lea.hbm %s1, %s184
      %s186 = smul.u32 %s153, 16
      %s187 = scalar_lea.vmem [#allocation2], %s186
      %s188 = scalar_lea.sflag [#allocation3], %s153
      %s190 = sshll.u32 %s187, 4
      %s191 = int_to_ptr.vmem [resolvable:$true] %s190
      %193 = dma.hbm_to_vmem [thread:$0]  %s185, 32, %s191, %s188, 64, 128, 1
      %s194 = sshrl.u32 %s161, 2
      %s195 = sand.u32 %s161, 3
      %s196 = smul.u32 %s194, 8
      %s197 = sadd.s32 %s195, %s196
      %s198 = smul.u32 %s160, 8
      %s199 = sadd.s32 %s197, %s198
      %s200 = smul.addr %s199, 16
      %s201 = scalar_lea.hbm %s1, %s200
      %s202 = sadd.s32 1, %s186
      %s203 = scalar_lea.vmem [#allocation2], %s202
      %s205 = sshll.u32 %s203, 4
      %s206 = int_to_ptr.vmem [resolvable:$true] %s205
      %208 = dma.hbm_to_vmem [thread:$0]  %s201, 32, %s206, %s188, 64, 128, 1
      %s209 = sshrl.u32 %s165, 2
      %s210 = sand.u32 %s165, 3
      %s211 = smul.u32 %s209, 8
      %s212 = sadd.s32 %s210, %s211
      %s213 = smul.u32 %s164, 8
      %s214 = sadd.s32 %s212, %s213
      %s215 = smul.addr %s214, 16
      %s216 = scalar_lea.hbm %s1, %s215
      %s217 = sadd.s32 2, %s186
      %s218 = scalar_lea.vmem [#allocation2], %s217
      %s220 = sshll.u32 %s218, 4
      %s221 = int_to_ptr.vmem [resolvable:$true] %s220
      %223 = dma.hbm_to_vmem [thread:$0]  %s216, 32, %s221, %s188, 64, 128, 1
      %s224 = sshrl.u32 %s169, 2
      %s225 = sand.u32 %s169, 3
      %s226 = smul.u32 %s224, 8
      %s227 = sadd.s32 %s225, %s226
      %s228 = smul.u32 %s168, 8
      %s229 = sadd.s32 %s227, %s228
      %s230 = smul.addr %s229, 16
      %s231 = scalar_lea.hbm %s1, %s230
      %s232 = sadd.s32 3, %s186
      %s233 = scalar_lea.vmem [#allocation2], %s232
      %s235 = sshll.u32 %s233, 4
      %s236 = int_to_ptr.vmem [resolvable:$true] %s235
      %238 = dma.hbm_to_vmem [thread:$0]  %s231, 32, %s236, %s188, 64, 128, 1
      %s239 = sshrl.u32 %s173, 2
      %s240 = sand.u32 %s173, 3
      %s241 = smul.u32 %s239, 8
      %s242 = sadd.s32 %s240, %s241
      %s243 = smul.u32 %s172, 8
      %s244 = sadd.s32 %s242, %s243
      %s245 = smul.addr %s244, 16
      %s246 = scalar_lea.hbm %s1, %s245
      %s247 = sadd.s32 4, %s186
      %s248 = scalar_lea.vmem [#allocation2], %s247
      %s250 = sshll.u32 %s248, 4
      %s251 = int_to_ptr.vmem [resolvable:$true] %s250
      %253 = dma.hbm_to_vmem [thread:$0]  %s246, 32, %s251, %s188, 64, 128, 1
      %s254 = sshrl.u32 %s177, 2
      %s255 = sand.u32 %s177, 3
      %s256 = smul.u32 %s254, 8
      %s257 = sadd.s32 %s255, %s256
      %s258 = smul.u32 %s176, 8
      %s259 = sadd.s32 %s257, %s258
      %s260 = smul.addr %s259, 16
      %s261 = scalar_lea.hbm %s1, %s260
      %s262 = sadd.s32 5, %s186
      %s263 = scalar_lea.vmem [#allocation2], %s262
      %s265 = sshll.u32 %s263, 4
      %s266 = int_to_ptr.vmem [resolvable:$true] %s265
      %268 = dma.hbm_to_vmem [thread:$0]  %s261, 32, %s266, %s188, 64, 128, 1
    $region9: #{tpu_custom_call.1} parent=1 // pred_fallthru
      _
    %s269 = smul.u32 %s17, 6
    %p270 = scmp.lt.s32.totalorder %s269, 5
    %s271 = scalar_select %p270, %s269, 5
    %s272 = sld [smem:[#allocation5 + %s271]]
    %s273 = sadd.s32 %s269, 1
    %p274 = scmp.lt.s32.totalorder %s273, 5
    %s275 = scalar_select %p274, %s273, 5
    %s276 = sld [smem:[#allocation5 + %s275]]
    %s277 = sadd.s32 %s269, 2
    %p278 = scmp.lt.s32.totalorder %s277, 5
    %s279 = scalar_select %p278, %s277, 5
    %s280 = sld [smem:[#allocation5 + %s279]]
    %s281 = sadd.s32 %s269, 3
    %p282 = scmp.lt.s32.totalorder %s281, 5
    %s283 = scalar_select %p282, %s281, 5
    %s284 = sld [smem:[#allocation5 + %s283]]
    %s285 = sadd.s32 %s269, 4
    %p286 = scmp.lt.s32.totalorder %s285, 5
    %s287 = scalar_select %p286, %s285, 5
    %s288 = sld [smem:[#allocation5 + %s287]]
    %s289 = sadd.s32 %s269, 5
    %p290 = scmp.lt.s32.totalorder %s289, 5
    %s291 = scalar_select %p290, %s289, 5
    %s292 = sld [smem:[#allocation5 + %s291]]
    %s293 = scalar_lea.sflag [#allocation3], %s25
    %s294 = smul.u32 1, 2
    %s295 = sshll.u32 %s294, 4
    %296 = dma.done %s293, %s295
    %s297 = sshll.u32 %s294, 4
    %298 = dma.done %s293, %s297
    %s299 = sshll.u32 %s294, 4
    %300 = dma.done %s293, %s299
    %s301 = sshll.u32 %s294, 4
    %302 = dma.done %s293, %s301
    %s303 = sshll.u32 %s294, 4
    %304 = dma.done %s293, %s303
    %s305 = sshll.u32 %s294, 4
    %306 = dma.done %s293, %s305
    %s307 = smul.u32 %s25, 2
    %s308 = smul.addr %s307, 8
    %s309 = scalar_lea.vmem [#allocation2], %s308
    %v310 = vld [vmem:[%s309] sm:$0x3f]
    %v311 = vld [vmem:[%s309 + $0x8] sm:$0x3f]
    %v312 = vxor.u32 %v310, 2147483648
    %v313 = vxor.u32 %v311, 2147483648
    %v314 = vmul.f32 %v312, 1.442695
    %v315 = vpow.pop %v314
    %v316 = vmul.f32 %v313, 1.442695
    %v317 = vpow.pop %v316
    %v318 = vadd.f32 %v315, 1.0
    %v319 = vadd.f32 %v317, 1.0
    %v320 = vrcp.pop %v318
    %v321 = vmul.f32 1.0, %v320
    %v322 = vrcp.pop %v319
    %v323 = vmul.f32 1.0, %v322
    %324 = vst [vmem:[#allocation6] sm:$0x3f] %v321
    %325 = vst [vmem:[#allocation6 + $0x8] sm:$0x3f] %v323
    // Predicated region
    $region10: #{tpu_custom_call.1} parent=1 // pred_check
      _
    $region11: #{tpu_custom_call.1} parent=1 // pred_check_branch
      %327 = sbr.rel (0) target = $region13
    $region12: #{tpu_custom_call.1} parent=1 // pred_region
      %s328 = sadd.s32 0, 0
      %p329 = scmp.lt.s32.totalorder %s328, 0
      %s330 = scalar_select %p329, %s328, 0
      %s332 = ssub.s32 256, 256
      %333 = vsyncadd [#allocation7], %s332
      %s334 = smul.addr %s330, 2
      %s335 = smul.addr %s334, 128
      %s336 = scalar_lea.hbm %s2, %s335
      %s338 = sshll.u32 [#allocation6], 4
      %s339 = int_to_ptr.vmem [resolvable:$true] %s338
      %341 = dma.vmem_to_hbm [thread:$0]  %s339, 256, %s336, [#allocation7]
    $region13: #{tpu_custom_call.1} parent=1 // pred_fallthru
      _
    // Predicated region
    $region14: #{tpu_custom_call.1} parent=1 // pred_check
      _
    $region15: #{tpu_custom_call.1} parent=1 // pred_check_branch
      %343 = sbr.rel (0) target = $region17
    $region16: #{tpu_custom_call.1} parent=1 // pred_region
      %344 = dma.done [#allocation7], 256
    $region17: #{tpu_custom_call.1} parent=1 // pred_fallthru
      _
    %345 = vsyncpa [#allocation7], 1
  %346 = vsyncmov [#allocation3]
  %s347 = vpop.sfrf %346
  %p348 = scmp.eq.s32.totalorder %s347, 0
  %p349 = pneg %p348
  %351 = shalt.err (%p349)
  %s352 = scalar_lea.sflag [#allocation3], 1
  %353 = vsyncmov %s352
  %s354 = vpop.sfrf %353
  %p355 = scmp.eq.s32.totalorder %s354, 0
  %p356 = pneg %p355
  %358 = shalt.err (%p356)

</llo_original>
